<compile_context>
chip_gen: v7x
topology: tpu7x:2x2x1
jax: 0.10.0
libtpu: 0.0.40
codegen_flags: <defaults>
</compile_context>

<pallas_src>
import numpy as np
import jax
import jax.numpy as jnp
from jax.experimental import pallas as pl
from jax.experimental.pallas import tpu as pltpu


# ----------------------------------------------------------------------------
# Anchor construction (deterministic, same as the A2J generate_anchors / shift)
# ----------------------------------------------------------------------------
def generate_anchors(p_h=None, p_w=None):
    if p_h is None:
        p_h = np.array([2, 6, 10, 14])
    if p_w is None:
        p_w = np.array([2, 6, 10, 14])
    num_anchors = len(p_h) * len(p_w)
    anchors = np.zeros((num_anchors, 2), dtype=np.float64)
    k = 0
    for i in range(len(p_w)):
        for j in range(len(p_h)):
            anchors[k, 1] = p_w[j]
            anchors[k, 0] = p_h[i]
            k += 1
    return anchors


def shift(shape, stride, anchors):
    shift_h = np.arange(0, shape[0]) * stride
    shift_w = np.arange(0, shape[1]) * stride
    shift_h, shift_w = np.meshgrid(shift_h, shift_w)
    shifts = np.vstack((shift_h.ravel(), shift_w.ravel())).transpose()
    A = anchors.shape[0]
    K = shifts.shape[0]
    all_anchors = (anchors.reshape((1, A, 2)) +
                   shifts.reshape((1, K, 2)).transpose((1, 0, 2)))
    return all_anchors.reshape((K * A, 2)).astype(np.float32)


# ----------------------------------------------------------------------------
# Pallas kernel
#   anchor_ref : (2, A)          row 0 = anchor x, row 1 = anchor y  (lane-dense)
#   jc_ref     : (bt, J, A)      joint classifications (A on lanes)
#   off_ref    : (2, bt, J, A)   plane 0 = off_x, plane 1 = off_y
#   out_ref    : (2, bt, J)      plane 0 = pred_x, plane 1 = pred_y
# ----------------------------------------------------------------------------
def _postprocess_kernel(anchor_ref, jc_ref, off_ref, out_ref):
    jc = jc_ref[...]                                    # (bt, J, A)
    # softmax over the anchor axis (last axis here) — keep it unnormalized and
    # fold the 1/sum into the final per-joint result (cheap EUP/VPU work on a
    # (bt, J) tile instead of an (A, J)-sized divide).
    m = jnp.max(jc, axis=-1, keepdims=True)             # (bt, J, 1)
    e = jnp.exp(jc - m)                                 # (bt, J, A) unnormalized w
    denom = jnp.sum(e, axis=-1)                         # (bt, J)

    ax = anchor_ref[0:1, :]                             # (1, A) anchor x (col 0)
    ay = anchor_ref[1:2, :]                             # (1, A) anchor y (col 1)

    # weighted sum over anchors of (anchor + offset), A is the lane axis.
    px = jnp.sum(e * (ax + off_ref[0]), axis=-1)        # (bt, J)
    py = jnp.sum(e * (ay + off_ref[1]), axis=-1)        # (bt, J)

    inv = 1.0 / denom                                   # tiny (bt, J) reciprocal
    out_ref[0] = px * inv
    out_ref[1] = py * inv


def post_process(all_anchors, joint_classifications, offset_regressions,
                 depth_regressions=None, *, batch_tile=None):
    """Matches PostProcess.forward: returns a list (length B) of (J, 4) arrays.

    depth_regressions is accepted for API parity but intentionally unused: the
    original module computes prediction_depth and then discards it (the output
    is cat(prediction_xy, prediction_xy)).
    """
    del depth_regressions  # never needed for the returned values
    B, A, J = joint_classifications.shape
    bt = B if batch_tile is None else batch_tile
    assert B % bt == 0, "batch_tile must divide the batch size"

    # Layout plumbing (one transpose each) so anchors ride the lane axis and
    # off_x / off_y arrive as contiguous planes — no host-side stride-2 gathers.
    anchors_t = jnp.transpose(all_anchors.astype(jnp.float32))        # (2, A)
    jc_t = jnp.transpose(joint_classifications, (0, 2, 1))            # (B, J, A)
    off_t = jnp.transpose(offset_regressions, (3, 0, 2, 1))           # (2, B, J, A)

    out = pl.pallas_call(
        _postprocess_kernel,
        out_shape=jax.ShapeDtypeStruct((2, B, J), jnp.float32),
        grid_spec=pltpu.PrefetchScalarGridSpec(
            num_scalar_prefetch=0,
            grid=(B // bt,),   # single fused step for small B; batch-tiled (and
                               # megacore-parallel) for large B
            in_specs=[
                pl.BlockSpec((2, A), lambda i: (0, 0)),            # anchors (shared)
                pl.BlockSpec((bt, J, A), lambda i: (i, 0, 0)),     # joint cls
                pl.BlockSpec((2, bt, J, A), lambda i: (0, i, 0, 0)),  # offsets x/y
            ],
            out_specs=pl.BlockSpec((2, bt, J), lambda i: (0, i, 0)),
        ),
        compiler_params=pltpu.CompilerParams(
            dimension_semantics=("parallel",)),
    )(anchors_t, jc_t, off_t)

    # (2, B, J) -> (B, J, 2) -> cat((xy, xy), 1) -> (B, J, 4); slice into the
    # list-of-tensors return of the original module.
    xy = jnp.transpose(out, (1, 2, 0))                 # (B, J, 2)
    preds = jnp.concatenate([xy, xy], axis=-1)         # (B, J, 4)
    return [preds[i] for i in range(B)]


# ----------------------------------------------------------------------------
# Pure-JAX reference of the PyTorch forward (for correctness check)
# ----------------------------------------------------------------------------
def post_process_ref(all_anchors, jc, off, depth):
    preds = []
    for i in range(jc.shape[0]):
        w = jax.nn.softmax(jc[i], axis=0)                      # (A, J)
        xy_reg = all_anchors[:, None, :] + off[i]              # (A, J, 2)
        pred_xy = jnp.sum(w[..., None] * xy_reg, axis=0)       # (J, 2)
        _pred_d = jnp.sum(w * depth[i], axis=0)                # (J,) unused
        preds.append(jnp.concatenate([pred_xy, pred_xy], axis=1))
    return preds


if __name__ == "__main__":
    # Small, deterministic configuration:
    #   feature-map shape 2x2, stride 16, 16 anchor points per cell -> A = 64
    #   J = 16 joints, batch B = 2
    fmap_shape = [2, 2]
    stride = 16
    anchors_np = shift(fmap_shape, stride, generate_anchors())   # (64, 2)
    A = anchors_np.shape[0]
    J = 16
    B = 2

    all_anchors = jnp.asarray(anchors_np, dtype=jnp.float32)

    key = jax.random.PRNGKey(0)
    k1, k2, k3 = jax.random.split(key, 3)
    joint_classifications = jax.random.normal(k1, (B, A, J), dtype=jnp.float32)
    offset_regressions = jax.random.normal(k2, (B, A, J, 2), dtype=jnp.float32)
    depth_regressions = jax.random.normal(k3, (B, A, J), dtype=jnp.float32)

    preds = post_process(all_anchors, joint_classifications,
                         offset_regressions, depth_regressions)
    preds = [jax.block_until_ready(p) for p in preds]

    refs = post_process_ref(all_anchors, joint_classifications,
                            offset_regressions, depth_regressions)
    for p, r in zip(preds, refs):
        np.testing.assert_allclose(np.asarray(p), np.asarray(r),
                                   rtol=1e-5, atol=1e-5)

    print("KERNEL_OK")
</pallas_src>

<mosaic_0001>
module attributes {stable_mosaic.version = 11 : i64} {
  func.func @_postprocess_kernel(%arg0: i32, %arg1: memref<2x64xf32, #tpu.memory_space<vmem>>, %arg2: memref<2x16x64xf32, #tpu.memory_space<vmem>>, %arg3: memref<2x2x16x64xf32, #tpu.memory_space<vmem>>, %arg4: memref<2x2x16xf32, #tpu.memory_space<vmem>>) attributes {dimension_semantics = [#tpu.dimension_semantics<parallel>], iteration_bounds = array<i64: 1>, scalar_prefetch = 0 : i64, scratch_operands = 0 : i64, tpu.core_type = #tpu.core_type<tc>, window_params = [{pipeline_mode = #tpu.pipeline_mode<synchronous>, transform_indices = @transform_0, window_bounds = array<i64: 2, 64>}, {transform_indices = @transform_1, window_bounds = array<i64: 2, 16, 64>}, {transform_indices = @transform_2, window_bounds = array<i64: 2, 2, 16, 64>}, {transform_indices = @transform_3, window_bounds = array<i64: 2, 2, 16>}]} {
    %c0 = arith.constant 0 : index
    %c0_0 = arith.constant 0 : index
    %c0_1 = arith.constant 0 : index
    %0 = vector.load %arg2[%c0, %c0_0, %c0_1] : memref<2x16x64xf32, #tpu.memory_space<vmem>>, vector<2x16x64xf32>
    %cst = arith.constant dense<0xFF800000> : vector<2x16xf32>
    %1 = vector.multi_reduction <maximumf>, %0, %cst [2] : vector<2x16x64xf32> to vector<2x16xf32>
    %2 = vector.shape_cast %1 : vector<2x16xf32> to vector<2x16x1xf32>
    %3 = vector.broadcast %2 : vector<2x16x1xf32> to vector<2x16x64xf32>
    %4 = arith.subf %0, %3 : vector<2x16x64xf32>
    %5 = math.exp %4 : vector<2x16x64xf32>
    %cst_2 = arith.constant dense<0.000000e+00> : vector<2x16xf32>
    %6 = vector.multi_reduction <add>, %5, %cst_2 [2] : vector<2x16x64xf32> to vector<2x16xf32>
    %c0_3 = arith.constant 0 : index
    %c0_4 = arith.constant 0 : index
    %7 = vector.load %arg1[%c0_3, %c0_4] : memref<2x64xf32, #tpu.memory_space<vmem>>, vector<1x64xf32>
    %c1 = arith.constant 1 : index
    %c0_5 = arith.constant 0 : index
    %8 = vector.load %arg1[%c1, %c0_5] : memref<2x64xf32, #tpu.memory_space<vmem>>, vector<1x64xf32>
    %c0_6 = arith.constant 0 : index
    %c0_7 = arith.constant 0 : index
    %c0_8 = arith.constant 0 : index
    %c0_9 = arith.constant 0 : index
    %9 = vector.load %arg3[%c0_6, %c0_7, %c0_8, %c0_9] : memref<2x2x16x64xf32, #tpu.memory_space<vmem>>, vector<1x2x16x64xf32>
    %10 = vector.shape_cast %9 : vector<1x2x16x64xf32> to vector<2x16x64xf32>
    %11 = vector.shape_cast %7 : vector<1x64xf32> to vector<1x1x64xf32>
    %12 = vector.broadcast %11 : vector<1x1x64xf32> to vector<2x16x64xf32>
    %13 = arith.addf %12, %10 : vector<2x16x64xf32>
    %14 = arith.mulf %5, %13 : vector<2x16x64xf32>
    %cst_10 = arith.constant dense<0.000000e+00> : vector<2x16xf32>
    %15 = vector.multi_reduction <add>, %14, %cst_10 [2] : vector<2x16x64xf32> to vector<2x16xf32>
    %c1_11 = arith.constant 1 : index
    %c0_12 = arith.constant 0 : index
    %c0_13 = arith.constant 0 : index
    %c0_14 = arith.constant 0 : index
    %16 = vector.load %arg3[%c1_11, %c0_12, %c0_13, %c0_14] : memref<2x2x16x64xf32, #tpu.memory_space<vmem>>, vector<1x2x16x64xf32>
    %17 = vector.shape_cast %16 : vector<1x2x16x64xf32> to vector<2x16x64xf32>
    %18 = vector.shape_cast %8 : vector<1x64xf32> to vector<1x1x64xf32>
    %19 = vector.broadcast %18 : vector<1x1x64xf32> to vector<2x16x64xf32>
    %20 = arith.addf %19, %17 : vector<2x16x64xf32>
    %21 = arith.mulf %5, %20 : vector<2x16x64xf32>
    %cst_15 = arith.constant dense<0.000000e+00> : vector<2x16xf32>
    %22 = vector.multi_reduction <add>, %21, %cst_15 [2] : vector<2x16x64xf32> to vector<2x16xf32>
    %cst_16 = arith.constant 1.000000e+00 : f32
    %23 = vector.broadcast %cst_16 : f32 to vector<2x16xf32>
    %24 = arith.divf %23, %6 : vector<2x16xf32>
    %25 = arith.mulf %15, %24 : vector<2x16xf32>
    %c0_17 = arith.constant 0 : index
    %c0_18 = arith.constant 0 : index
    %c0_19 = arith.constant 0 : index
    %26 = vector.load %arg4[%c0_17, %c0_18, %c0_19] : memref<2x2x16xf32, #tpu.memory_space<vmem>>, vector<1x2x16xf32>
    %27 = vector.shape_cast %26 : vector<1x2x16xf32> to vector<2x16xf32>
    %28 = vector.shape_cast %25 : vector<2x16xf32> to vector<1x2x16xf32>
    tpu.vector_store %arg4[%c0_17, %c0_18, %c0_19], %28 {strides = array<i32>} : memref<2x2x16xf32, #tpu.memory_space<vmem>>, vector<1x2x16xf32>,
    %29 = arith.mulf %22, %24 : vector<2x16xf32>
    %c1_20 = arith.constant 1 : index
    %c0_21 = arith.constant 0 : index
    %c0_22 = arith.constant 0 : index
    %30 = vector.load %arg4[%c1_20, %c0_21, %c0_22] : memref<2x2x16xf32, #tpu.memory_space<vmem>>, vector<1x2x16xf32>
    %31 = vector.shape_cast %30 : vector<1x2x16xf32> to vector<2x16xf32>
    %32 = vector.shape_cast %29 : vector<2x16xf32> to vector<1x2x16xf32>
    tpu.vector_store %arg4[%c1_20, %c0_21, %c0_22], %32 {strides = array<i32>} : memref<2x2x16xf32, #tpu.memory_space<vmem>>, vector<1x2x16xf32>,
    return
  }
  func.func @transform_0(%arg0: i32) -> (i32, i32) {
    %c0_i32 = arith.constant 0 : i32
    %c0_i32_0 = arith.constant 0 : i32
    %c0_i32_1 = arith.constant 0 : i32
    return %c0_i32, %c0_i32_0 : i32, i32
  }
  func.func @transform_1(%arg0: i32) -> (i32, i32, i32) {
    %c0_i32 = arith.constant 0 : i32
    %c0_i32_0 = arith.constant 0 : i32
    %c0_i32_1 = arith.constant 0 : i32
    return %arg0, %c0_i32, %c0_i32_0 : i32, i32, i32
  }
  func.func @transform_2(%arg0: i32) -> (i32, i32, i32, i32) {
    %c0_i32 = arith.constant 0 : i32
    %c0_i32_0 = arith.constant 0 : i32
    %c0_i32_1 = arith.constant 0 : i32
    %c0_i32_2 = arith.constant 0 : i32
    return %c0_i32, %arg0, %c0_i32_0, %c0_i32_1 : i32, i32, i32, i32
  }
  func.func @transform_3(%arg0: i32) -> (i32, i32, i32) {
    %c0_i32 = arith.constant 0 : i32
    %c0_i32_0 = arith.constant 0 : i32
    %c0_i32_1 = arith.constant 0 : i32
    return %c0_i32, %arg0, %c0_i32_0 : i32, i32, i32
  }
}

</mosaic_0001>

<llo_original>
// kernel: tpu_custom_call.1
$region0: #{tpu_custom_call.1}
  #allocation0 [shape = 'u32[]', space=smem, size = 0x4, offset = 0x4, fixed_abs, tag = 'smem constant byte address 0x4 - core index']
  #allocation1 [shape = 'u32[144,128]{1,0:T(1,128)}', space=vmem, size = 0x12000, scoped, tag = 'internal scratch']
  %s0 = inlined_call_operand.hbm [shape: f32[2,64], index: 0, kind: input, shape index: {}]
  %s1 = inlined_call_operand.hbm [shape: f32[2,16,64], index: 1, kind: input, shape index: {}]
  %s2 = inlined_call_operand.hbm [shape: f32[2,2,16,64], index: 2, kind: input, shape index: {}]
  %s3 = inlined_call_operand.hbm [shape: f32[2,2,16], index: 3, kind: output, shape index: {}]
  %s4 = sld [smem:[#allocation0]]
  $region34: #{tpu_custom_call.1} parent=0
    _
  %s6 = ssub.s32 1, %s4
  %s7 = scalar_select 0, %s6, %s4
  $region1: #{tpu_custom_call.1} parent=0
    #allocation2 [shape = 'u8[1024]{0}', space=vmem, size = 0x400, scoped, tag = 'input window, operand 0, single buffered']
    #allocation3 [shape = 's32[1]{0}', space=sflag, size = 0x4, scoped, tag = 'scoped memory for tpu_custom_call.1']
    #allocation4 [shape = 's32[1]{0}', space=sflag, size = 0x4, scoped, tag = 'scoped memory for tpu_custom_call.1']
    #allocation5 [shape = 'u8[16384]{0}', space=vmem, size = 0x4000, scoped, tag = 'input window, operand 1, single buffered']
    #allocation6 [shape = 's32[1]{0}', space=sflag, size = 0x4, scoped, tag = 'scoped memory for tpu_custom_call.1']
    #allocation7 [shape = 'u8[32768]{0}', space=vmem, size = 0x8000, scoped, tag = 'input window, operand 2, single buffered']
    #allocation8 [shape = 'u8[2048]{0}', space=vmem, size = 0x800, scoped, tag = 'output window, operand 0, single buffered']
    %8 = vsyncpa [#allocation3], 0
    %9 = vsyncpa [#allocation6], 0
    %10 = vsyncpa [#allocation4], 0
    // Predicated region
    $region2: #{tpu_custom_call.1} parent=1 // pred_check
      _
    $region3: #{tpu_custom_call.1} parent=1 // pred_check_branch
      %12 = sbr.rel (0) target = $region5
    $region4: #{tpu_custom_call.1} parent=1 // pred_region
      %s14 = ssub.s32 32, 32
      %15 = vsyncadd [#allocation3], %s14
      %s17 = sshll.u32 [#allocation2], 4
      %s18 = int_to_ptr.vmem [resolvable:$true] %s17
      %20 = dma.hbm_to_vmem [thread:$0]  %s0, 32, %s18, [#allocation3]
    $region5: #{tpu_custom_call.1} parent=1 // pred_fallthru
      _
    // Predicated region
    $region6: #{tpu_custom_call.1} parent=1 // pred_check
      _
    $region7: #{tpu_custom_call.1} parent=1 // pred_check_branch
      %22 = sbr.rel (0) target = $region9
    $region8: #{tpu_custom_call.1} parent=1 // pred_region
      %s24 = ssub.s32 512, 512
      %25 = vsyncadd [#allocation6], %s24
      %s26 = sshll.u32 [#allocation5], 4
      %s27 = int_to_ptr.vmem [resolvable:$true] %s26
      %32 = dma.hbm_to_vmem [thread:$0]  %s1, 512, %s27, [#allocation6], 128, 128, 8
    $region9: #{tpu_custom_call.1} parent=1 // pred_fallthru
      _
    // Predicated region
    $region10: #{tpu_custom_call.1} parent=1 // pred_check
      _
    $region11: #{tpu_custom_call.1} parent=1 // pred_check_branch
      %34 = sbr.rel (0) target = $region13
    $region12: #{tpu_custom_call.1} parent=1 // pred_region
      %s36 = ssub.s32 1024, 1024
      %37 = vsyncadd [#allocation6], %s36
      %s38 = sshll.u32 [#allocation7], 4
      %s39 = int_to_ptr.vmem [resolvable:$true] %s38
      %44 = dma.hbm_to_vmem [thread:$0]  %s2, 1024, %s39, [#allocation6], 128, 128, 8
    $region13: #{tpu_custom_call.1} parent=1 // pred_fallthru
      _
    // Predicated region
    $region14: #{tpu_custom_call.1} parent=1 // pred_check
      _
    $region15: #{tpu_custom_call.1} parent=1 // pred_check_branch
      %46 = sbr.rel (0) target = $region17
    $region16: #{tpu_custom_call.1} parent=1 // pred_region
      %47 = dma.done [#allocation3], 32
    $region17: #{tpu_custom_call.1} parent=1 // pred_fallthru
      _
    // Predicated region
    $region18: #{tpu_custom_call.1} parent=1 // pred_check
      _
    $region19: #{tpu_custom_call.1} parent=1 // pred_check_branch
      %49 = sbr.rel (0) target = $region21
    $region20: #{tpu_custom_call.1} parent=1 // pred_region
      %50 = dma.done [#allocation6], 512
    $region21: #{tpu_custom_call.1} parent=1 // pred_fallthru
      _
    // Predicated region
    $region22: #{tpu_custom_call.1} parent=1 // pred_check
      _
    $region23: #{tpu_custom_call.1} parent=1 // pred_check_branch
      %52 = sbr.rel (0) target = $region25
    $region24: #{tpu_custom_call.1} parent=1 // pred_region
      %53 = dma.done [#allocation6], 1024
    $region25: #{tpu_custom_call.1} parent=1 // pred_fallthru
      _
    %v54 = vld [vmem:[#allocation5] sm:$0xff]
    %v55 = vld [vmem:[#allocation5 + $0x8] sm:$0xff]
    %v56 = vld [vmem:[#allocation5 + $0x10] sm:$0xff]
    %v57 = vld [vmem:[#allocation5 + $0x18] sm:$0xff]
    %vm58 = vcmask 523264
    %v59 = vsel %vm58, %v54, -inf
    %60 = vmax.xlane.f32.xlu0 %v59
    %v61 = vpop.xlane.xlu0 %60
    %v62 = vsel %vm58, %v55, -inf
    %63 = vmax.xlane.f32.xlu0 %v62
    %v64 = vpop.xlane.xlu0 %63
    %v65 = vsel %vm58, %v56, -inf
    %66 = vmax.xlane.f32.xlu0 %v65
    %v67 = vpop.xlane.xlu0 %66
    %v68 = vsel %vm58, %v57, -inf
    %69 = vmax.xlane.f32.xlu0 %v68
    %v70 = vpop.xlane.xlu0 %69
    %v71 = vsub.f32 %v54, %v61
    %v72 = vsub.f32 %v55, %v64
    %v73 = vsub.f32 %v56, %v67
    %v74 = vsub.f32 %v57, %v70
    %v75 = vmul.f32 %v71, 1.442695
    %v76 = vpow.pop %v75
    %v77 = vmul.f32 %v72, 1.442695
    %v78 = vpow.pop %v77
    %v79 = vmul.f32 %v73, 1.442695
    %v80 = vpow.pop %v79
    %v81 = vmul.f32 %v74, 1.442695
    %v82 = vpow.pop %v81
    %v83 = vsel %vm58, %v76, 0.0
    %84 = vadd.xlane.f32.xlu0 %v83
    %v85 = vpop.xlane.xlu0 %84
    %v86 = vsel %vm58, %v78, 0.0
    %87 = vadd.xlane.f32.xlu0 %v86
    %v88 = vpop.xlane.xlu0 %87
    %v89 = vsel %vm58, %v80, 0.0
    %90 = vadd.xlane.f32.xlu0 %v89
    %v91 = vpop.xlane.xlu0 %90
    %v92 = vsel %vm58, %v82, 0.0
    %93 = vadd.xlane.f32.xlu0 %v92
    %v94 = vpop.xlane.xlu0 %93
    %v95 = vld [vmem:[#allocation2] sm:$0x1]
    %v96 = vld [vmem:[#allocation2 + $0x1] sm:$0x1]
    %v97 = vld [vmem:[#allocation7] sm:$0xff]
    %v98 = vld [vmem:[#allocation7 + $0x8] sm:$0xff]
    %v99 = vld [vmem:[#allocation7 + $0x10] sm:$0xff]
    %v100 = vld [vmem:[#allocation7 + $0x18] sm:$0xff]
    %v101 = vlaneseq
    %v102 = vshrl.u32 %v101, 7
    %v103 = vsub.s32 0, %v102
    %v104 = vrot.slane %v95, %v103
    %v105 = vadd.f32 %v104, %v97
    %v106 = vadd.f32 %v104, %v98
    %v107 = vadd.f32 %v104, %v99
    %v108 = vadd.f32 %v104, %v100
    %v109 = vmul.f32 %v76, %v105
    %v110 = vmul.f32 %v78, %v106
    %v111 = vmul.f32 %v80, %v107
    %v112 = vmul.f32 %v82, %v108
    %v113 = vsel %vm58, %v109, 0.0
    %114 = vadd.xlane.f32.xlu0 %v113
    %v115 = vpop.xlane.xlu0 %114
    %v116 = vsel %vm58, %v110, 0.0
    %117 = vadd.xlane.f32.xlu0 %v116
    %v118 = vpop.xlane.xlu0 %117
    %v119 = vsel %vm58, %v111, 0.0
    %120 = vadd.xlane.f32.xlu0 %v119
    %v121 = vpop.xlane.xlu0 %120
    %v122 = vsel %vm58, %v112, 0.0
    %123 = vadd.xlane.f32.xlu0 %v122
    %v124 = vpop.xlane.xlu0 %123
    %s125 = scalar_lea.vmem [#allocation7], 32
    %v126 = vld [vmem:[%s125] sm:$0xff]
    %v127 = vld [vmem:[%s125 + $0x8] sm:$0xff]
    %v128 = vld [vmem:[%s125 + $0x10] sm:$0xff]
    %v129 = vld [vmem:[%s125 + $0x18] sm:$0xff]
    %v130 = vlaneseq
    %v131 = vshrl.u32 %v130, 7
    %v132 = vsub.s32 0, %v131
    %v133 = vrot.slane %v96, %v132
    %v134 = vadd.f32 %v133, %v126
    %v135 = vadd.f32 %v133, %v127
    %v136 = vadd.f32 %v133, %v128
    %v137 = vadd.f32 %v133, %v129
    %v138 = vmul.f32 %v76, %v134
    %v139 = vmul.f32 %v78, %v135
    %v140 = vmul.f32 %v80, %v136
    %v141 = vmul.f32 %v82, %v137
    %v142 = vsel %vm58, %v138, 0.0
    %143 = vadd.xlane.f32.xlu0 %v142
    %v144 = vpop.xlane.xlu0 %143
    %v145 = vsel %vm58, %v139, 0.0
    %146 = vadd.xlane.f32.xlu0 %v145
    %v147 = vpop.xlane.xlu0 %146
    %v148 = vsel %vm58, %v140, 0.0
    %149 = vadd.xlane.f32.xlu0 %v148
    %v150 = vpop.xlane.xlu0 %149
    %v151 = vsel %vm58, %v141, 0.0
    %152 = vadd.xlane.f32.xlu0 %v151
    %v153 = vpop.xlane.xlu0 %152
    %v154 = vrcp.pop %v85
    %v155 = vmul.f32 1.0, %v154
    %v156 = vrcp.pop %v88
    %v157 = vmul.f32 1.0, %v156
    %v158 = vrcp.pop %v91
    %v159 = vmul.f32 1.0, %v158
    %v160 = vrcp.pop %v94
    %v161 = vmul.f32 1.0, %v160
    %v162 = vmul.f32 %v115, %v155
    %v163 = vmul.f32 %v118, %v157
    %v164 = vmul.f32 %v121, %v159
    %v165 = vmul.f32 %v124, %v161
    %v170 = vlaneseq
    %v171 = vand.u32 %v170, 127
    %v172 = vlaneseq
    %v173 = vshrl.u32 %v172, 7
    %v174 = vsub.s32 %v171, %v173
    %v175 = vrot.slane %v162, %v174
    %v176 = vadd.s32 %v171, 4294967288
    %v177 = vlaneseq
    %v178 = vshrl.u32 %v177, 7
    %v179 = vsub.s32 %v176, %v178
    %v180 = vrot.slane %v163, %v179
    %vm181 = vcmask 130112
    %v182 = vsel %vm181, %v180, %v175
    %v183 = vlaneseq
    %v184 = vshrl.u32 %v183, 7
    %v185 = vsub.s32 %v171, %v184
    %v186 = vrot.slane %v164, %v185
    %v187 = vlaneseq
    %v188 = vshrl.u32 %v187, 7
    %v189 = vsub.s32 %v176, %v188
    %v190 = vrot.slane %v165, %v189
    %v191 = vsel %vm181, %v190, %v186
    %vm192 = vcmask 1041409
    %v193 = vsel %vm192, %v191, %v182
    %vm195 = vcmask 123904
    %196 = vst.msk [vmem:[#allocation8] sm:$0x3] %vm195, %v193
    %v197 = vmul.f32 %v144, %v155
    %v198 = vmul.f32 %v147, %v157
    %v199 = vmul.f32 %v150, %v159
    %v200 = vmul.f32 %v153, %v161
    %v205 = vlaneseq
    %v206 = vshrl.u32 %v205, 7
    %v207 = vsub.s32 %v171, %v206
    %v208 = vrot.slane %v197, %v207
    %v209 = vlaneseq
    %v210 = vshrl.u32 %v209, 7
    %v211 = vsub.s32 %v176, %v210
    %v212 = vrot.slane %v198, %v211
    %v213 = vsel %vm181, %v212, %v208
    %v214 = vlaneseq
    %v215 = vshrl.u32 %v214, 7
    %v216 = vsub.s32 %v171, %v215
    %v217 = vrot.slane %v199, %v216
    %v218 = vlaneseq
    %v219 = vshrl.u32 %v218, 7
    %v220 = vsub.s32 %v176, %v219
    %v221 = vrot.slane %v200, %v220
    %v222 = vsel %vm181, %v221, %v217
    %v223 = vsel %vm192, %v222, %v213
    %s225 = scalar_lea.vmem [#allocation8], 2
    %226 = vst.msk [vmem:[%s225] sm:$0x3] %vm195, %v223
    // Predicated region
    $region26: #{tpu_custom_call.1} parent=1 // pred_check
      _
    $region27: #{tpu_custom_call.1} parent=1 // pred_check_branch
      %228 = sbr.rel (0) target = $region29
    $region28: #{tpu_custom_call.1} parent=1 // pred_region
      %s230 = ssub.s32 64, 64
      %231 = vsyncadd [#allocation4], %s230
      %s232 = sshll.u32 [#allocation8], 4
      %s233 = int_to_ptr.vmem [resolvable:$true] %s232
      %238 = dma.vmem_to_hbm [thread:$0]  %s233, 64, %s3, [#allocation4], 32, 32, 2
    $region29: #{tpu_custom_call.1} parent=1 // pred_fallthru
      _
    // Predicated region
    $region30: #{tpu_custom_call.1} parent=1 // pred_check
      _
    $region31: #{tpu_custom_call.1} parent=1 // pred_check_branch
      %240 = sbr.rel (0) target = $region33
    $region32: #{tpu_custom_call.1} parent=1 // pred_region
      %241 = dma.done [#allocation4], 64
    $region33: #{tpu_custom_call.1} parent=1 // pred_fallthru
      _
    %242 = vsyncpa [#allocation3], 1
    %243 = vsyncpa [#allocation6], 1
    %244 = vsyncpa [#allocation4], 1

</llo_original>
